<compile_context>
chip_gen: v7x
topology: tpu7x:2x2x1
jax: 0.10.0
libtpu: 0.0.40
codegen_flags: <defaults>
</compile_context>

<pallas_src>
import functools

import jax
import jax.numpy as jnp
from jax.experimental import pallas as pl
from jax.experimental.pallas import tpu as pltpu

EPS = 1e-5

# VMEM sizing (generation-aware, conservative for v7x's 64 MiB / TensorCore):
#   - block-selection budget for all pipelined buffers + fp32 temporaries
#   - explicit scoped-VMEM limit handed to Mosaic (default scoped limit is
#     32 MiB, which would reject the larger tiles that reach ~85% of HBM
#     roofline on v5e/v6e).
_VMEM_SELECT_BUDGET = 32 * 1024 * 1024   # used to size the row tile
_VMEM_LIMIT_BYTES = 48 * 1024 * 1024     # < 64 MiB physical on v7x
_MAX_TILE_ROWS = 1024


def _ln_kernel_bias(x_ref, w_ref, b_ref, o_ref):
    # x_ref: (tr, H), w_ref/b_ref: (1, H), o_ref: (tr, H)
    x = x_ref[...].astype(jnp.float32)
    mean = jnp.mean(x, axis=-1, keepdims=True)
    centered = x - mean
    # F.layer_norm uses the biased variance (divide by H); two-pass centered
    # form kept for numerical fidelity (this kernel is HBM-bound anyway).
    var = jnp.mean(centered * centered, axis=-1, keepdims=True)
    y = centered * jax.lax.rsqrt(var + EPS)
    y = y * w_ref[...].astype(jnp.float32) + b_ref[...].astype(jnp.float32)
    o_ref[...] = y.astype(o_ref.dtype)


def _ln_kernel_nobias(x_ref, w_ref, o_ref):
    x = x_ref[...].astype(jnp.float32)
    mean = jnp.mean(x, axis=-1, keepdims=True)
    centered = x - mean
    var = jnp.mean(centered * centered, axis=-1, keepdims=True)
    y = centered * jax.lax.rsqrt(var + EPS)
    y = y * w_ref[...].astype(jnp.float32)
    o_ref[...] = y.astype(o_ref.dtype)


def _round_up(n, m):
    return ((n + m - 1) // m) * m


def _pick_tile_rows(rows, hidden, itemsize):
    """Large, fixed row tile: multiple of the sublane granule, VMEM-budgeted."""
    # Sublane granule: 8 for 4-byte dtypes, 16 for bf16, 32 for 1-byte dtypes.
    sub = max(8, 32 // max(itemsize, 1))
    # Per-row VMEM estimate: x double-buffered + out double-buffered
    # (2 * 2 * itemsize) plus ~3 live fp32 copies of the tile during compute.
    bytes_per_row = hidden * (4 * itemsize + 3 * 4)
    tr = _VMEM_SELECT_BUDGET // max(bytes_per_row, 1)
    tr = min(tr, _MAX_TILE_ROWS)
    tr = min(tr, _round_up(rows, sub))     # don't exceed (padded) row count
    tr = max((tr // sub) * sub, sub)       # multiple of sublane granule, >= 1 granule
    return tr


@jax.jit
def layer_norm(x, weight, bias=None):
    """LayerNorm over the last dim of x, matching F.layer_norm(..., eps=1e-5)."""
    orig_shape = x.shape
    hidden = orig_shape[-1]
    rows = 1
    for d in orig_shape[:-1]:
        rows *= d

    # TODO(synk): for hidden < 128 (e.g. the demo's H=32), stores are
    # lane-masked; a lane-packing layout (several rows per 128-lane vreg with a
    # segmented reduction) would be the next optimization for tiny hidden dims.

    x2d = x.reshape(rows, hidden)
    w2d = weight.reshape(1, hidden)

    tr = _pick_tile_rows(rows, hidden, x.dtype.itemsize)

    # Pad rows up to a multiple of the (fixed, large) tile — keeps the block
    # second-to-last dim a multiple of the sublane granule regardless of shape
    # and avoids shrinking the tile for awkward row counts.
    rows_p = _round_up(rows, tr)
    if rows_p != rows:
        x2d = jnp.pad(x2d, ((0, rows_p - rows), (0, 0)))

    grid = (rows_p // tr,)

    x_spec = pl.BlockSpec((tr, hidden), lambda i: (i, 0))
    p_spec = pl.BlockSpec((1, hidden), lambda i: (0, 0))
    out_spec = pl.BlockSpec((tr, hidden), lambda i: (i, 0))

    compiler_params = pltpu.CompilerParams(
        # Row axis is embarrassingly parallel: lets v7x split the slab across
        # its 2 TensorCores.  No effect on v5e/v6e (1 TC).
        dimension_semantics=("parallel",),
        vmem_limit_bytes=_VMEM_LIMIT_BYTES,
    )

    if bias is None:
        out = pl.pallas_call(
            _ln_kernel_nobias,
            out_shape=jax.ShapeDtypeStruct((rows_p, hidden), x.dtype),
            grid_spec=pltpu.PrefetchScalarGridSpec(
                num_scalar_prefetch=0,
                grid=grid,
                in_specs=[x_spec, p_spec],
                out_specs=out_spec,
            ),
            compiler_params=compiler_params,
        )(x2d, w2d)
    else:
        b2d = bias.reshape(1, hidden)
        out = pl.pallas_call(
            _ln_kernel_bias,
            out_shape=jax.ShapeDtypeStruct((rows_p, hidden), x.dtype),
            grid_spec=pltpu.PrefetchScalarGridSpec(
                num_scalar_prefetch=0,
                grid=grid,
                in_specs=[x_spec, p_spec, p_spec],
                out_specs=out_spec,
            ),
            compiler_params=compiler_params,
        )(x2d, w2d, b2d)

    if rows_p != rows:
        out = out[:rows]
    return out.reshape(orig_shape)


def layer_norm_ref(x, weight, bias=None):
    xf = x.astype(jnp.float32)
    mean = jnp.mean(xf, axis=-1, keepdims=True)
    var = jnp.mean((xf - mean) ** 2, axis=-1, keepdims=True)
    y = (xf - mean) * jax.lax.rsqrt(var + EPS)
    y = y * weight.astype(jnp.float32)
    if bias is not None:
        y = y + bias.astype(jnp.float32)
    return y.astype(x.dtype)


if __name__ == "__main__":
    # Small shapes consistent with the module: batch=2, seq=8, hidden=32.
    B, T, H = 2, 8, 32
    key = jax.random.PRNGKey(0)
    kx, = jax.random.split(key, 1)
    x = jax.random.normal(kx, (B, T, H), dtype=jnp.float32)

    # Deterministic parameter init per module __init__: weight=ones, bias=zeros.
    weight = jnp.ones((H,), dtype=jnp.float32)
    bias = jnp.zeros((H,), dtype=jnp.float32)

    # bias=True path
    out = jax.block_until_ready(layer_norm(x, weight, bias))
    ref = layer_norm_ref(x, weight, bias)
    assert jnp.allclose(out, ref, atol=1e-5, rtol=1e-5), "mismatch (bias=True)"

    # bias=False path (LayerNorm(ndim, bias=False)) — compiles the no-bias kernel.
    out_nb = jax.block_until_ready(layer_norm(x, weight, None))
    ref_nb = layer_norm_ref(x, weight, None)
    assert jnp.allclose(out_nb, ref_nb, atol=1e-5, rtol=1e-5), "mismatch (bias=False)"

    # Ragged row count (exercises the padded cdiv-style grid; rows = 3*5 = 15).
    x_odd = jax.random.normal(jax.random.PRNGKey(1), (3, 5, H), dtype=jnp.float32)
    out_odd = jax.block_until_ready(layer_norm(x_odd, weight, bias))
    ref_odd = layer_norm_ref(x_odd, weight, bias)
    assert jnp.allclose(out_odd, ref_odd, atol=1e-5, rtol=1e-5), "mismatch (ragged rows)"

    print("KERNEL_OK")
</pallas_src>

<mosaic_0001>
module attributes {stable_mosaic.version = 11 : i64} {
  func.func @_ln_kernel_bias(%arg0: i32, %arg1: memref<16x32xf32, #tpu.memory_space<vmem>>, %arg2: memref<1x32xf32, #tpu.memory_space<vmem>>, %arg3: memref<1x32xf32, #tpu.memory_space<vmem>>, %arg4: memref<16x32xf32, #tpu.memory_space<vmem>>) attributes {dimension_semantics = [#tpu.dimension_semantics<parallel>], iteration_bounds = array<i64: 1>, scalar_prefetch = 0 : i64, scratch_operands = 0 : i64, tpu.core_type = #tpu.core_type<tc>, window_params = [{transform_indices = @transform_0, window_bounds = array<i64: 16, 32>}, {pipeline_mode = #tpu.pipeline_mode<synchronous>, transform_indices = @transform_1, window_bounds = array<i64: 1, 32>}, {pipeline_mode = #tpu.pipeline_mode<synchronous>, transform_indices = @transform_2, window_bounds = array<i64: 1, 32>}, {transform_indices = @transform_3, window_bounds = array<i64: 16, 32>}]} {
    %c0 = arith.constant 0 : index
    %c0_0 = arith.constant 0 : index
    %0 = vector.load %arg1[%c0, %c0_0] : memref<16x32xf32, #tpu.memory_space<vmem>>, vector<16x32xf32>
    %cst = arith.constant dense<0.000000e+00> : vector<16xf32>
    %1 = vector.multi_reduction <add>, %0, %cst [1] : vector<16x32xf32> to vector<16xf32>
    %2 = vector.shape_cast %1 : vector<16xf32> to vector<16x1xf32>
    %cst_1 = arith.constant 3.200000e+01 : f32
    %3 = vector.broadcast %cst_1 : f32 to vector<16x1xf32>
    %4 = arith.divf %2, %3 : vector<16x1xf32>
    %5 = vector.broadcast %4 : vector<16x1xf32> to vector<16x32xf32>
    %6 = arith.subf %0, %5 : vector<16x32xf32>
    %7 = arith.mulf %6, %6 : vector<16x32xf32>
    %cst_2 = arith.constant dense<0.000000e+00> : vector<16xf32>
    %8 = vector.multi_reduction <add>, %7, %cst_2 [1] : vector<16x32xf32> to vector<16xf32>
    %9 = vector.shape_cast %8 : vector<16xf32> to vector<16x1xf32>
    %cst_3 = arith.constant 3.200000e+01 : f32
    %10 = vector.broadcast %cst_3 : f32 to vector<16x1xf32>
    %11 = arith.divf %9, %10 : vector<16x1xf32>
    %cst_4 = arith.constant 9.99999974E-6 : f32
    %12 = vector.broadcast %cst_4 : f32 to vector<16x1xf32>
    %13 = arith.addf %11, %12 : vector<16x1xf32>
    %14 = math.rsqrt %13 : vector<16x1xf32>
    %15 = vector.broadcast %14 : vector<16x1xf32> to vector<16x32xf32>
    %16 = arith.mulf %6, %15 : vector<16x32xf32>
    %c0_5 = arith.constant 0 : index
    %c0_6 = arith.constant 0 : index
    %17 = vector.load %arg2[%c0_5, %c0_6] : memref<1x32xf32, #tpu.memory_space<vmem>>, vector<1x32xf32>
    %18 = vector.broadcast %17 : vector<1x32xf32> to vector<16x32xf32>
    %19 = arith.mulf %16, %18 : vector<16x32xf32>
    %c0_7 = arith.constant 0 : index
    %c0_8 = arith.constant 0 : index
    %20 = vector.load %arg3[%c0_7, %c0_8] : memref<1x32xf32, #tpu.memory_space<vmem>>, vector<1x32xf32>
    %21 = vector.broadcast %20 : vector<1x32xf32> to vector<16x32xf32>
    %22 = arith.addf %19, %21 : vector<16x32xf32>
    %c0_9 = arith.constant 0 : index
    %c0_10 = arith.constant 0 : index
    %23 = vector.load %arg4[%c0_9, %c0_10] : memref<16x32xf32, #tpu.memory_space<vmem>>, vector<16x32xf32>
    tpu.vector_store %arg4[%c0_9, %c0_10], %22 {strides = array<i32>} : memref<16x32xf32, #tpu.memory_space<vmem>>, vector<16x32xf32>,
    return
  }
  func.func @transform_0(%arg0: i32) -> (i32, i32) {
    %c0_i32 = arith.constant 0 : i32
    %c0_i32_0 = arith.constant 0 : i32
    return %arg0, %c0_i32 : i32, i32
  }
  func.func @transform_1(%arg0: i32) -> (i32, i32) {
    %c0_i32 = arith.constant 0 : i32
    %c0_i32_0 = arith.constant 0 : i32
    %c0_i32_1 = arith.constant 0 : i32
    return %c0_i32, %c0_i32_0 : i32, i32
  }
  func.func @transform_2(%arg0: i32) -> (i32, i32) {
    %c0_i32 = arith.constant 0 : i32
    %c0_i32_0 = arith.constant 0 : i32
    %c0_i32_1 = arith.constant 0 : i32
    return %c0_i32, %c0_i32_0 : i32, i32
  }
  func.func @transform_3(%arg0: i32) -> (i32, i32) {
    %c0_i32 = arith.constant 0 : i32
    %c0_i32_0 = arith.constant 0 : i32
    return %arg0, %c0_i32 : i32, i32
  }
}

</mosaic_0001>

<llo_original>
// kernel: layer_norm.1
$region0: #{layer_norm.1}
  #allocation0 [shape = 'u32[]', space=smem, size = 0x4, offset = 0x4, fixed_abs, tag = 'smem constant byte address 0x4 - core index']
  #allocation1 [shape = 'u32[144,128]{1,0:T(1,128)}', space=vmem, size = 0x12000, scoped, tag = 'internal scratch']
  %s0 = inlined_call_operand.hbm [shape: f32[16,32], index: 0, kind: input, shape index: {}]
  %s1 = inlined_call_operand.vmem [shape: f32[1,32], index: 1, kind: input, shape index: {}]
  %s2 = inlined_call_operand.vmem [shape: f32[1,32], index: 2, kind: input, shape index: {}]
  %s3 = inlined_call_operand.hbm [shape: f32[16,32], index: 3, kind: output, shape index: {}]
  %s4 = sld [smem:[#allocation0]]
  $region26: #{layer_norm.1} parent=0
    _
  %s6 = ssub.s32 1, %s4
  %s7 = scalar_select 0, %s6, %s4
  $region1: #{layer_norm.1} parent=0
    #allocation2 [shape = 'u8[8192]{0}', space=vmem, size = 0x2000, scoped, tag = 'input window, operand 0, single buffered']
    #allocation3 [shape = 's32[1]{0}', space=sflag, size = 0x4, scoped, tag = 'scoped memory for layer_norm.1']
    #allocation4 [shape = 's32[1]{0}', space=sflag, size = 0x4, scoped, tag = 'scoped memory for layer_norm.1']
    #allocation5 [shape = 'u8[8192]{0}', space=vmem, size = 0x2000, scoped, tag = 'output window, operand 0, single buffered']
    %8 = vsyncpa [#allocation3], 0
    %9 = vsyncpa [#allocation4], 0
    // Predicated region
    $region2: #{layer_norm.1} parent=1 // pred_check
      _
    $region3: #{layer_norm.1} parent=1 // pred_check_branch
      %11 = sbr.rel (0) target = $region5
    $region4: #{layer_norm.1} parent=1 // pred_region
      %s13 = ssub.s32 256, 256
      %14 = vsyncadd [#allocation3], %s13
      %s15 = sshll.u32 [#allocation2], 4
      %s16 = int_to_ptr.vmem [resolvable:$true] %s15
      %21 = dma.hbm_to_vmem [thread:$0]  %s0, 256, %s16, [#allocation3], 128, 128, 8
    $region5: #{layer_norm.1} parent=1 // pred_fallthru
      _
    // Predicated region
    $region6: #{layer_norm.1} parent=1 // pred_check
      _
    $region7: #{layer_norm.1} parent=1 // pred_check_branch
      %23 = sbr.rel (0) target = $region9
    $region8: #{layer_norm.1} parent=1 // pred_region
      _
    $region9: #{layer_norm.1} parent=1 // pred_fallthru
      _
    // Predicated region
    $region10: #{layer_norm.1} parent=1 // pred_check
      _
    $region11: #{layer_norm.1} parent=1 // pred_check_branch
      %25 = sbr.rel (0) target = $region13
    $region12: #{layer_norm.1} parent=1 // pred_region
      _
    $region13: #{layer_norm.1} parent=1 // pred_fallthru
      _
    // Predicated region
    $region14: #{layer_norm.1} parent=1 // pred_check
      _
    $region15: #{layer_norm.1} parent=1 // pred_check_branch
      %27 = sbr.rel (0) target = $region17
    $region16: #{layer_norm.1} parent=1 // pred_region
      %28 = dma.done [#allocation3], 256
    $region17: #{layer_norm.1} parent=1 // pred_fallthru
      _
    %v29 = vld [vmem:[#allocation2] sm:$0xff]
    %v30 = vld [vmem:[#allocation2 + $0x8] sm:$0xff]
    %vm31 = vcmask 261120
    %v32 = vsel %vm31, %v29, 0.0
    %33 = vadd.xlane.f32.xlu0 %v32
    %v34 = vpop.xlane.xlu0 %33
    %v35 = vsel %vm31, %v30, 0.0
    %36 = vadd.xlane.f32.xlu0 %v35
    %v37 = vpop.xlane.xlu0 %36
    %v38 = vrcp.pop 32.0
    %v39 = vmul.f32 %v34, %v38
    %v40 = vmul.f32 %v37, %v38
    %v41 = vsub.f32 %v29, %v39
    %v42 = vsub.f32 %v30, %v40
    %v43 = vmul.f32 %v41, %v41
    %v44 = vmul.f32 %v42, %v42
    %v45 = vsel %vm31, %v43, 0.0
    %46 = vadd.xlane.f32.xlu0 %v45
    %v47 = vpop.xlane.xlu0 %46
    %v48 = vsel %vm31, %v44, 0.0
    %49 = vadd.xlane.f32.xlu0 %v48
    %v50 = vpop.xlane.xlu0 %49
    %v51 = vmul.f32 %v47, %v38
    %v52 = vmul.f32 %v50, %v38
    %v53 = vadd.f32 %v51, 1e-05
    %v54 = vadd.f32 %v52, 1e-05
    %v55 = vrsqrt.pop %v53
    %v56 = vrsqrt.pop %v54
    %v57 = vmul.f32 %v41, %v55
    %v58 = vmul.f32 %v42, %v56
    %v59 = vld [vmem:[%s1] sm:$0x1]
    %v61 = vlaneseq
    %v62 = vshrl.u32 %v61, 7
    %v63 = vsub.s32 0, %v62
    %v64 = vrot.slane %v59, %v63
    %v66 = vmul.f32 %v57, %v64
    %v67 = vmul.f32 %v58, %v64
    %v68 = vld [vmem:[%s2] sm:$0x1]
    %v70 = vlaneseq
    %v71 = vshrl.u32 %v70, 7
    %v72 = vsub.s32 0, %v71
    %v73 = vrot.slane %v68, %v72
    %v75 = vadd.f32 %v66, %v73
    %v76 = vadd.f32 %v67, %v73
    %77 = vst.msk [vmem:[#allocation5] sm:$0xff] %vm31, %v75
    %78 = vst.msk [vmem:[#allocation5 + $0x8] sm:$0xff] %vm31, %v76
    // Predicated region
    $region18: #{layer_norm.1} parent=1 // pred_check
      _
    $region19: #{layer_norm.1} parent=1 // pred_check_branch
      %80 = sbr.rel (0) target = $region21
    $region20: #{layer_norm.1} parent=1 // pred_region
      %s82 = ssub.s32 256, 256
      %83 = vsyncadd [#allocation4], %s82
      %s84 = sshll.u32 [#allocation5], 4
      %s85 = int_to_ptr.vmem [resolvable:$true] %s84
      %90 = dma.vmem_to_hbm [thread:$0]  %s85, 256, %s3, [#allocation4], 128, 128, 8
    $region21: #{layer_norm.1} parent=1 // pred_fallthru
      _
    // Predicated region
    $region22: #{layer_norm.1} parent=1 // pred_check
      _
    $region23: #{layer_norm.1} parent=1 // pred_check_branch
      %92 = sbr.rel (0) target = $region25
    $region24: #{layer_norm.1} parent=1 // pred_region
      %93 = dma.done [#allocation4], 256
    $region25: #{layer_norm.1} parent=1 // pred_fallthru
      _
    %94 = vsyncpa [#allocation3], 1
    %95 = vsyncpa [#allocation4], 1

</llo_original>
